<compile_context>
chip_gen: v6e
topology: v6e:2x2x1
jax: 0.10.0
libtpu: 0.0.40
codegen_flags: <defaults>
</compile_context>

<pallas_src>
import functools
import math

import jax
import jax.numpy as jnp
from jax.experimental import pallas as pl
from jax.experimental.pallas import tpu as pltpu

HIDDEN_LAYERS = 5
NEURONS = 64
IN_DIM = 2
OUT_DIM = 3
_LANE = 128


def pinn_kernel(x_ref, wf_ref, wm_ref, wl_ref, b_ref, o_ref, *, compute_dtype):
    """Fused 6-layer MLP for one batch tile (batch on the lane axis)."""
    x = x_ref[...]                       # (2, tile)  f32
    wf = wf_ref[...]                     # (64, 2)    f32

    # Layer 0 on the VPU (K=2 is a pathological MXU shape): two broadcast-FMAs.
    # x rows broadcast over sublanes (stride-0, free); the (64,1) weight
    # columns broadcast over lanes.
    z = (wf[:, 0:1] * x[0:1, :]
         + wf[:, 1:2] * x[1:2, :]
         + b_ref[:, 0:1])                # (64, tile) f32
    h = jnp.tanh(z.astype(compute_dtype))

    # 4 inner (64, 64) layers; weights stacked as (4, 64, 64), static slices.
    # In bf16 mode the bias-add + tanh run in bf16 so h feeds the next matmul
    # directly (no extra astype, half the EUP traffic on v6e/v7x).
    for k in range(HIDDEN_LAYERS - 1):
        acc = jnp.dot(wm_ref[k], h, preferred_element_type=jnp.float32)
        h = jnp.tanh((acc + b_ref[:, k + 1:k + 2]).astype(compute_dtype))

    # Output layer (64 -> 3); w_last is sublane-padded to (8, 64).
    out = jnp.dot(wl_ref[...], h, preferred_element_type=jnp.float32)  # (8, tile)
    b_last = b_ref[0:OUT_DIM, HIDDEN_LAYERS:HIDDEN_LAYERS + 1]         # (3, 1)
    o_ref[...] = (out[0:OUT_DIM, :] + b_last).astype(o_ref.dtype)


def init_params(key, hidden_layers=HIDDEN_LAYERS, neurons=NEURONS):
    """Xavier-uniform weights stored as (in, out) (== nn.Linear math), zero biases."""
    dims = [IN_DIM] + [neurons] * hidden_layers + [OUT_DIM]
    params = []
    for i in range(len(dims) - 1):
        fan_in, fan_out = dims[i], dims[i + 1]
        key, sub = jax.random.split(key)
        bound = math.sqrt(6.0 / (fan_in + fan_out))
        w = jax.random.uniform(sub, (fan_in, fan_out), minval=-bound,
                               maxval=bound, dtype=jnp.float32)
        b = jnp.zeros((fan_out,), dtype=jnp.float32)
        params.append((w, b))
    return params


def pack_params(params, compute_dtype=jnp.float32):
    """Pack the 6 (w, b) pairs into 4 VMEM slabs (transposed (out, in) weights).

    Matmul weights are stored directly in the compute dtype so no per-call
    convert/copy happens in the forward wrapper.
    """
    (w0, b0), *mid, (w5, b5) = params
    w_first = w0.T.astype(jnp.float32)                                  # (64, 2)
    w_mid = jnp.stack([w.T for w, _ in mid], 0).astype(compute_dtype)   # (4,64,64)
    w_last = jnp.zeros((8, NEURONS), jnp.float32).at[:OUT_DIM].set(w5.T)
    w_last = w_last.astype(compute_dtype)                               # (8, 64)
    b_cols = jnp.zeros((NEURONS, HIDDEN_LAYERS + 1), jnp.float32)       # (64, 6)
    b_cols = b_cols.at[:, 0].set(b0)
    for k, (_, b) in enumerate(mid):
        b_cols = b_cols.at[:, k + 1].set(b)
    b_cols = b_cols.at[:OUT_DIM, HIDDEN_LAYERS].set(b5)
    return w_first, w_mid, w_last, b_cols


def _ceil_div(a, b):
    return -(-a // b)


def _choose_tile(n, tm):
    """Pick the lane-axis batch tile (multiple of 128) and grid-step count.

    Forces an even number of grid steps (>= 2) whenever n > 128 so the single
    'parallel' grid axis shards evenly across v7x's two TensorCores; tiles are
    ~tm so the ~0.35us per-step overhead is amortized on big batches.
    """
    if n <= _LANE:
        return _LANE, 1
    steps = max(2, _ceil_div(n, tm))
    if steps % 2:
        steps += 1
    tile = _ceil_div(_ceil_div(n, steps), _LANE) * _LANE
    return tile, steps


@functools.partial(jax.jit, static_argnames=("tm",))
def pinn_forward(x, packed, *, tm=2048):
    """x: (N, 2) float32 collocation points, any N. Returns (N, 3) float32."""
    w_first, w_mid, w_last, b_cols = packed
    compute_dtype = w_mid.dtype          # static; set by pack_params
    N = x.shape[0]
    assert x.shape[1] == IN_DIM

    tile, steps = _choose_tile(N, tm)
    n_pad = tile * steps

    # Lane-dense layout: batch on lanes (transposes are 8/12 bytes per row).
    x_t = x.T.astype(jnp.float32)                        # (2, N)
    if n_pad != N:
        x_t = jnp.pad(x_t, ((0, 0), (0, n_pad - N)))

    kernel = functools.partial(pinn_kernel, compute_dtype=compute_dtype)

    flops = 2 * n_pad * (IN_DIM * NEURONS
                         + (HIDDEN_LAYERS - 1) * NEURONS * NEURONS
                         + NEURONS * OUT_DIM)
    transcendentals = HIDDEN_LAYERS * n_pad * NEURONS
    weight_bytes = sum(int(a.size) * a.dtype.itemsize
                       for a in (w_first, w_mid, w_last, b_cols))
    bytes_accessed = n_pad * (IN_DIM + OUT_DIM) * 4 + weight_bytes

    out_t = pl.pallas_call(
        kernel,
        out_shape=jax.ShapeDtypeStruct((OUT_DIM, n_pad), jnp.float32),
        grid_spec=pltpu.PrefetchScalarGridSpec(
            num_scalar_prefetch=0,
            grid=(steps,),
            in_specs=[
                pl.BlockSpec((IN_DIM, tile), lambda i: (0, i)),
                pl.BlockSpec(w_first.shape, lambda i: (0, 0)),
                pl.BlockSpec(w_mid.shape, lambda i: (0, 0, 0)),
                pl.BlockSpec(w_last.shape, lambda i: (0, 0)),
                pl.BlockSpec(b_cols.shape, lambda i: (0, 0)),
            ],
            out_specs=pl.BlockSpec((OUT_DIM, tile), lambda i: (0, i)),
        ),
        compiler_params=pltpu.CompilerParams(
            dimension_semantics=("parallel",),
            vmem_limit_bytes=32 * 1024 * 1024),
        cost_estimate=pl.CostEstimate(
            flops=flops,
            transcendentals=transcendentals,
            bytes_accessed=bytes_accessed),
    )(x_t, w_first, w_mid, w_last, b_cols)

    out_t = out_t[:, :N] if n_pad != N else out_t
    return out_t.T                                        # (N, 3)


def pinn_reference(x, params):
    h = x
    for i, (w, b) in enumerate(params):
        h = jnp.dot(h, w, precision=jax.lax.Precision.HIGHEST) + b
        if i < len(params) - 1:
            h = jnp.tanh(h)
    return h


if __name__ == "__main__":
    key = jax.random.PRNGKey(0)
    pkey, xkey = jax.random.split(key)

    params = init_params(pkey)

    N = 256  # small batch of (x, t) collocation points -> 2 grid steps
    x = jax.random.normal(xkey, (N, IN_DIM), dtype=jnp.float32)

    ref = pinn_reference(x, params)

    # f32 path (default): close to the highest-precision reference.
    packed_f32 = pack_params(params)
    out = jax.block_until_ready(pinn_forward(x, packed_f32))
    assert out.shape == (N, OUT_DIM)
    assert jnp.allclose(out, ref, atol=1e-4, rtol=1e-4), "f32 mismatch vs reference"

    # bf16-operand + bf16-tanh path (v6e/v7x perf option; f32 MXU accumulate).
    packed_bf16 = pack_params(params, compute_dtype=jnp.bfloat16)
    out_bf16 = jax.block_until_ready(pinn_forward(x, packed_bf16))
    assert jnp.allclose(out_bf16, ref, atol=1e-1, rtol=1e-1), "bf16 path diverged"

    print("KERNEL_OK")
</pallas_src>

<mosaic_0001>
module attributes {stable_mosaic.version = 11 : i64} {
  func.func @pinn_kernel(%arg0: i32, %arg1: memref<2x128xf32, #tpu.memory_space<vmem>>, %arg2: memref<64x2xf32, #tpu.memory_space<vmem>>, %arg3: memref<4x64x64xf32, #tpu.memory_space<vmem>>, %arg4: memref<8x64xf32, #tpu.memory_space<vmem>>, %arg5: memref<64x6xf32, #tpu.memory_space<vmem>>, %arg6: memref<3x128xf32, #tpu.memory_space<vmem>>) attributes {dimension_semantics = [#tpu.dimension_semantics<parallel>], iteration_bounds = array<i64: 2>, scalar_prefetch = 0 : i64, scratch_operands = 0 : i64, tpu.core_type = #tpu.core_type<tc>, window_params = [{transform_indices = @transform_0, window_bounds = array<i64: 2, 128>}, {pipeline_mode = #tpu.pipeline_mode<synchronous>, transform_indices = @transform_1, window_bounds = array<i64: 64, 2>}, {pipeline_mode = #tpu.pipeline_mode<synchronous>, transform_indices = @transform_2, window_bounds = array<i64: 4, 64, 64>}, {pipeline_mode = #tpu.pipeline_mode<synchronous>, transform_indices = @transform_3, window_bounds = array<i64: 8, 64>}, {pipeline_mode = #tpu.pipeline_mode<synchronous>, transform_indices = @transform_4, window_bounds = array<i64: 64, 6>}, {transform_indices = @transform_5, window_bounds = array<i64: 3, 128>}]} {
    %c0 = arith.constant 0 : index
    %c0_0 = arith.constant 0 : index
    %0 = vector.load %arg1[%c0, %c0_0] : memref<2x128xf32, #tpu.memory_space<vmem>>, vector<2x128xf32>
    %c0_1 = arith.constant 0 : index
    %c0_2 = arith.constant 0 : index
    %1 = vector.load %arg2[%c0_1, %c0_2] : memref<64x2xf32, #tpu.memory_space<vmem>>, vector<64x2xf32>
    %2 = vector.extract_strided_slice %1 {offsets = [0, 0], sizes = [64, 1], strides = [1, 1]} : vector<64x2xf32> to vector<64x1xf32>
    %3 = vector.extract_strided_slice %0 {offsets = [0, 0], sizes = [1, 128], strides = [1, 1]} : vector<2x128xf32> to vector<1x128xf32>
    %4 = vector.broadcast %2 : vector<64x1xf32> to vector<64x128xf32>
    %5 = vector.broadcast %3 : vector<1x128xf32> to vector<64x128xf32>
    %6 = arith.mulf %4, %5 : vector<64x128xf32>
    %7 = vector.extract_strided_slice %1 {offsets = [0, 1], sizes = [64, 1], strides = [1, 1]} : vector<64x2xf32> to vector<64x1xf32>
    %8 = vector.extract_strided_slice %0 {offsets = [1, 0], sizes = [1, 128], strides = [1, 1]} : vector<2x128xf32> to vector<1x128xf32>
    %9 = vector.broadcast %7 : vector<64x1xf32> to vector<64x128xf32>
    %10 = vector.broadcast %8 : vector<1x128xf32> to vector<64x128xf32>
    %11 = arith.mulf %9, %10 : vector<64x128xf32>
    %12 = arith.addf %6, %11 : vector<64x128xf32>
    %c0_3 = arith.constant 0 : index
    %c0_4 = arith.constant 0 : index
    %13 = vector.load %arg5[%c0_3, %c0_4] : memref<64x6xf32, #tpu.memory_space<vmem>>, vector<64x1xf32>
    %14 = vector.broadcast %13 : vector<64x1xf32> to vector<64x128xf32>
    %15 = arith.addf %12, %14 : vector<64x128xf32>
    %16 = math.tanh %15 : vector<64x128xf32>
    %c0_5 = arith.constant 0 : index
    %c0_6 = arith.constant 0 : index
    %c0_7 = arith.constant 0 : index
    %17 = vector.load %arg3[%c0_5, %c0_6, %c0_7] : memref<4x64x64xf32, #tpu.memory_space<vmem>>, vector<1x64x64xf32>
    %18 = vector.shape_cast %17 : vector<1x64x64xf32> to vector<64x64xf32>
    %cst = arith.constant dense<0.000000e+00> : vector<64x128xf32>
    %19 = tpu.matmul %18, %16, %cst {dimension_numbers = #tpu.dot_dimension_numbers<[1], [0], [0], [1], [0, 0, 1, 1], [], []>} : vector<64x64xf32>, vector<64x128xf32>, vector<64x128xf32> -> vector<64x128xf32>
    %c0_8 = arith.constant 0 : index
    %c1 = arith.constant 1 : index
    %20 = vector.load %arg5[%c0_8, %c1] : memref<64x6xf32, #tpu.memory_space<vmem>>, vector<64x1xf32>
    %21 = vector.broadcast %20 : vector<64x1xf32> to vector<64x128xf32>
    %22 = arith.addf %19, %21 : vector<64x128xf32>
    %23 = math.tanh %22 : vector<64x128xf32>
    %c1_9 = arith.constant 1 : index
    %c0_10 = arith.constant 0 : index
    %c0_11 = arith.constant 0 : index
    %24 = vector.load %arg3[%c1_9, %c0_10, %c0_11] : memref<4x64x64xf32, #tpu.memory_space<vmem>>, vector<1x64x64xf32>
    %25 = vector.shape_cast %24 : vector<1x64x64xf32> to vector<64x64xf32>
    %cst_12 = arith.constant dense<0.000000e+00> : vector<64x128xf32>
    %26 = tpu.matmul %25, %23, %cst_12 {dimension_numbers = #tpu.dot_dimension_numbers<[1], [0], [0], [1], [0, 0, 1, 1], [], []>} : vector<64x64xf32>, vector<64x128xf32>, vector<64x128xf32> -> vector<64x128xf32>
    %c0_13 = arith.constant 0 : index
    %c2 = arith.constant 2 : index
    %27 = vector.load %arg5[%c0_13, %c2] : memref<64x6xf32, #tpu.memory_space<vmem>>, vector<64x1xf32>
    %28 = vector.broadcast %27 : vector<64x1xf32> to vector<64x128xf32>
    %29 = arith.addf %26, %28 : vector<64x128xf32>
    %30 = math.tanh %29 : vector<64x128xf32>
    %c2_14 = arith.constant 2 : index
    %c0_15 = arith.constant 0 : index
    %c0_16 = arith.constant 0 : index
    %31 = vector.load %arg3[%c2_14, %c0_15, %c0_16] : memref<4x64x64xf32, #tpu.memory_space<vmem>>, vector<1x64x64xf32>
    %32 = vector.shape_cast %31 : vector<1x64x64xf32> to vector<64x64xf32>
    %cst_17 = arith.constant dense<0.000000e+00> : vector<64x128xf32>
    %33 = tpu.matmul %32, %30, %cst_17 {dimension_numbers = #tpu.dot_dimension_numbers<[1], [0], [0], [1], [0, 0, 1, 1], [], []>} : vector<64x64xf32>, vector<64x128xf32>, vector<64x128xf32> -> vector<64x128xf32>
    %c0_18 = arith.constant 0 : index
    %c3 = arith.constant 3 : index
    %34 = vector.load %arg5[%c0_18, %c3] : memref<64x6xf32, #tpu.memory_space<vmem>>, vector<64x1xf32>
    %35 = vector.broadcast %34 : vector<64x1xf32> to vector<64x128xf32>
    %36 = arith.addf %33, %35 : vector<64x128xf32>
    %37 = math.tanh %36 : vector<64x128xf32>
    %c3_19 = arith.constant 3 : index
    %c0_20 = arith.constant 0 : index
    %c0_21 = arith.constant 0 : index
    %38 = vector.load %arg3[%c3_19, %c0_20, %c0_21] : memref<4x64x64xf32, #tpu.memory_space<vmem>>, vector<1x64x64xf32>
    %39 = vector.shape_cast %38 : vector<1x64x64xf32> to vector<64x64xf32>
    %cst_22 = arith.constant dense<0.000000e+00> : vector<64x128xf32>
    %40 = tpu.matmul %39, %37, %cst_22 {dimension_numbers = #tpu.dot_dimension_numbers<[1], [0], [0], [1], [0, 0, 1, 1], [], []>} : vector<64x64xf32>, vector<64x128xf32>, vector<64x128xf32> -> vector<64x128xf32>
    %c0_23 = arith.constant 0 : index
    %c4 = arith.constant 4 : index
    %41 = vector.load %arg5[%c0_23, %c4] : memref<64x6xf32, #tpu.memory_space<vmem>>, vector<64x1xf32>
    %42 = vector.broadcast %41 : vector<64x1xf32> to vector<64x128xf32>
    %43 = arith.addf %40, %42 : vector<64x128xf32>
    %44 = math.tanh %43 : vector<64x128xf32>
    %c0_24 = arith.constant 0 : index
    %c0_25 = arith.constant 0 : index
    %45 = vector.load %arg4[%c0_24, %c0_25] : memref<8x64xf32, #tpu.memory_space<vmem>>, vector<8x64xf32>
    %cst_26 = arith.constant dense<0.000000e+00> : vector<8x128xf32>
    %46 = tpu.matmul %45, %44, %cst_26 {dimension_numbers = #tpu.dot_dimension_numbers<[1], [0], [0], [1], [0, 0, 1, 1], [], []>} : vector<8x64xf32>, vector<64x128xf32>, vector<8x128xf32> -> vector<8x128xf32>
    %c0_27 = arith.constant 0 : index
    %c5 = arith.constant 5 : index
    %47 = vector.load %arg5[%c0_27, %c5] : memref<64x6xf32, #tpu.memory_space<vmem>>, vector<3x1xf32>
    %48 = vector.extract_strided_slice %46 {offsets = [0, 0], sizes = [3, 128], strides = [1, 1]} : vector<8x128xf32> to vector<3x128xf32>
    %49 = vector.broadcast %47 : vector<3x1xf32> to vector<3x128xf32>
    %50 = arith.addf %48, %49 : vector<3x128xf32>
    %c0_28 = arith.constant 0 : index
    %c0_29 = arith.constant 0 : index
    %51 = vector.load %arg6[%c0_28, %c0_29] : memref<3x128xf32, #tpu.memory_space<vmem>>, vector<3x128xf32>
    tpu.vector_store %arg6[%c0_28, %c0_29], %50 {strides = array<i32>} : memref<3x128xf32, #tpu.memory_space<vmem>>, vector<3x128xf32>,
    return
  }
  func.func @transform_0(%arg0: i32) -> (i32, i32) {
    %c0_i32 = arith.constant 0 : i32
    %c0_i32_0 = arith.constant 0 : i32
    return %c0_i32, %arg0 : i32, i32
  }
  func.func @transform_1(%arg0: i32) -> (i32, i32) {
    %c0_i32 = arith.constant 0 : i32
    %c0_i32_0 = arith.constant 0 : i32
    %c0_i32_1 = arith.constant 0 : i32
    return %c0_i32, %c0_i32_0 : i32, i32
  }
  func.func @transform_2(%arg0: i32) -> (i32, i32, i32) {
    %c0_i32 = arith.constant 0 : i32
    %c0_i32_0 = arith.constant 0 : i32
    %c0_i32_1 = arith.constant 0 : i32
    %c0_i32_2 = arith.constant 0 : i32
    return %c0_i32, %c0_i32_0, %c0_i32_1 : i32, i32, i32
  }
  func.func @transform_3(%arg0: i32) -> (i32, i32) {
    %c0_i32 = arith.constant 0 : i32
    %c0_i32_0 = arith.constant 0 : i32
    %c0_i32_1 = arith.constant 0 : i32
    return %c0_i32, %c0_i32_0 : i32, i32
  }
  func.func @transform_4(%arg0: i32) -> (i32, i32) {
    %c0_i32 = arith.constant 0 : i32
    %c0_i32_0 = arith.constant 0 : i32
    %c0_i32_1 = arith.constant 0 : i32
    return %c0_i32, %c0_i32_0 : i32, i32
  }
  func.func @transform_5(%arg0: i32) -> (i32, i32) {
    %c0_i32 = arith.constant 0 : i32
    %c0_i32_0 = arith.constant 0 : i32
    return %c0_i32, %arg0 : i32, i32
  }
}

</mosaic_0001>

<llo_original>
// kernel: pinn_forward.1
$region0: #{pinn_forward.1}
  #allocation0 [shape = 'u32[]', space=smem, size = 0x4, offset = 0x4, fixed_abs, tag = 'smem constant byte address 0x4 - core index']
  #allocation1 [shape = 'u32[144,128]{1,0:T(1,128)}', space=vmem, size = 0x12000, scoped, tag = 'internal scratch']
  %s0 = inlined_call_operand.vmem [shape: f32[2,256], index: 0, kind: input, shape index: {}]
  %s1 = inlined_call_operand.vmem [shape: f32[64,2], index: 1, kind: input, shape index: {}]
  %s2 = inlined_call_operand.hbm [shape: f32[4,64,64], index: 2, kind: input, shape index: {}]
  %s3 = inlined_call_operand.vmem [shape: f32[8,64], index: 3, kind: input, shape index: {}]
  %s4 = inlined_call_operand.vmem [shape: f32[64,6], index: 4, kind: input, shape index: {}]
  %s5 = inlined_call_operand.hbm [shape: f32[3,256], index: 5, kind: output, shape index: {}]
  %s6 = sld [smem:[#allocation0]]
  $region57: #{pinn_forward.1} parent=0
    _
  %s8 = ssub.s32 1, %s6
  %s9 = scalar_select 0, %s8, %s6
  $region1: #{pinn_forward.1} parent=0
    #allocation2 [shape = 'u8[131072]{0}', space=vmem, size = 0x20000, scoped, tag = 'input window, operand 2, single buffered']
    #allocation3 [shape = 's32[2]{0}', space=sflag, size = 0x8, scoped, tag = 'scoped memory for pinn_forward.1']
    #allocation4 [shape = 's32[2]{0}', space=sflag, size = 0x8, scoped, tag = 'scoped memory for pinn_forward.1']
    #allocation5 [shape = 'u8[4096]{0}', space=vmem, size = 0x1000, scoped, tag = 'output window, operand 0']
    %10 = vsyncpa [#allocation3], 0
    %11 = vsyncpa [#allocation4], 0
    %s12 = scalar_lea.sflag [#allocation4], 1
    %13 = vsyncpa %s12, 0
    loop: start=0, step=1, limit=4
    $region2: #{pinn_forward.1} parent=1 // loop_pre_header
      _
    $region3: #{pinn_forward.1} parent=1 // loop_header
      %s15 = sphi 0, %s19
      %p16 = scmp.ge.s32.totalorder %s15, 4
      %s25 = sphi 0, %s27
      %s28 = sphi 0, %s25
      %s29 = sphi 0, %s28
      %s45 = sphi 0, %s29
      %s49 = sphi 0, %s49
      %s51 = sphi 0, %s49
      %s52 = sphi 0, %s51
      %s66 = sphi 0, %s52
      %s70 = sphi 0, %s70
      %s72 = sphi 0, %s70
      %s73 = sphi 0, %s72
      %s87 = sphi 0, %s73
      %s91 = sphi 0, %s91
      %s93 = sphi 0, %s91
      %s94 = sphi 0, %s93
      %s108 = sphi 0, %s94
      %s112 = sphi 0, %s112
      %s114 = sphi 0, %s112
      %s115 = sphi 0, %s114
      %s129 = sphi 0, %s115
      %s135 = sphi 0, %s137
      %s138 = sphi 0, %s135
      %s139 = sphi 0, %s138
      %s155 = sphi 0, %s139
    $region4: #{pinn_forward.1} parent=1 // loop_header_branch
      %18 = sbr.rel (%p16) target = $region8
    $region5: #{pinn_forward.1} parent=1 // loop_body
      %s20 = ssub.s32 %s15, 1
      %s21 = ssub.s32 %s15, 2
      %s22 = sadd.s32 %s15, 1
      %s23 = ssub.s32 %s15, %s22
      %p24 = scmp.eq.s32.totalorder %s23, 0
      %s26 = sadd.s32 %s25, 1
      %s27 = scalar_select %p24, %s25, %s26
      %p30 = pneg %p24
      %p31 = scmp.eq.s32.totalorder %s15, 1
      %p32 = por %p30, %p31
      %p33 = scmp.ne.s32.totalorder %s25, %s28
      %p34 = scmp.eq.s32.totalorder %s15, 0
      %p35 = por %p33, %p34
      %p36 = scmp.ne.s32.totalorder %s25, %s28
      %p37 = scmp.eq.s32.totalorder %s20, 1
      %p38 = por %p36, %p37
      %p39 = scmp.ne.s32.totalorder %s28, %s29
      %p40 = scmp.eq.s32.totalorder %s20, 0
      %p41 = por %p39, %p40
      %p42 = scmp.ne.s32.totalorder %s28, %s29
      %p43 = scmp.eq.s32.totalorder %s21, 1
      %p44 = por %p42, %p43
      %p46 = scmp.ne.s32.totalorder %s29, %s45
      %p47 = scmp.eq.s32.totalorder %s21, 0
      %p48 = por %p46, %p47
      %s50 = sadd.s32 %s49, 1
      %p53 = scmp.eq.s32.totalorder %s15, 1
      %p54 = scmp.ne.s32.totalorder %s49, %s51
      %p55 = scmp.eq.s32.totalorder %s15, 0
      %p56 = por %p54, %p55
      %p57 = scmp.ne.s32.totalorder %s49, %s51
      %p58 = scmp.eq.s32.totalorder %s20, 1
      %p59 = por %p57, %p58
      %p60 = scmp.ne.s32.totalorder %s51, %s52
      %p61 = scmp.eq.s32.totalorder %s20, 0
      %p62 = por %p60, %p61
      %p63 = scmp.ne.s32.totalorder %s51, %s52
      %p64 = scmp.eq.s32.totalorder %s21, 1
      %p65 = por %p63, %p64
      %p67 = scmp.ne.s32.totalorder %s52, %s66
      %p68 = scmp.eq.s32.totalorder %s21, 0
      %p69 = por %p67, %p68
      %s71 = sadd.s32 %s70, 1
      %p74 = scmp.eq.s32.totalorder %s15, 1
      %p75 = scmp.ne.s32.totalorder %s70, %s72
      %p76 = scmp.eq.s32.totalorder %s15, 0
      %p77 = por %p75, %p76
      %p78 = scmp.ne.s32.totalorder %s70, %s72
      %p79 = scmp.eq.s32.totalorder %s20, 1
      %p80 = por %p78, %p79
      %p81 = scmp.ne.s32.totalorder %s72, %s73
      %p82 = scmp.eq.s32.totalorder %s20, 0
      %p83 = por %p81, %p82
      %p84 = scmp.ne.s32.totalorder %s72, %s73
      %p85 = scmp.eq.s32.totalorder %s21, 1
      %p86 = por %p84, %p85
      %p88 = scmp.ne.s32.totalorder %s73, %s87
      %p89 = scmp.eq.s32.totalorder %s21, 0
      %p90 = por %p88, %p89
      %s92 = sadd.s32 %s91, 1
      %p95 = scmp.eq.s32.totalorder %s15, 1
      %p96 = scmp.ne.s32.totalorder %s91, %s93
      %p97 = scmp.eq.s32.totalorder %s15, 0
      %p98 = por %p96, %p97
      %p99 = scmp.ne.s32.totalorder %s91, %s93
      %p100 = scmp.eq.s32.totalorder %s20, 1
      %p101 = por %p99, %p100
      %p102 = scmp.ne.s32.totalorder %s93, %s94
      %p103 = scmp.eq.s32.totalorder %s20, 0
      %p104 = por %p102, %p103
      %p105 = scmp.ne.s32.totalorder %s93, %s94
      %p106 = scmp.eq.s32.totalorder %s21, 1
      %p107 = por %p105, %p106
      %p109 = scmp.ne.s32.totalorder %s94, %s108
      %p110 = scmp.eq.s32.totalorder %s21, 0
      %p111 = por %p109, %p110
      %s113 = sadd.s32 %s112, 1
      %p116 = scmp.eq.s32.totalorder %s15, 1
      %p117 = scmp.ne.s32.totalorder %s112, %s114
      %p118 = scmp.eq.s32.totalorder %s15, 0
      %p119 = por %p117, %p118
      %p120 = scmp.ne.s32.totalorder %s112, %s114
      %p121 = scmp.eq.s32.totalorder %s20, 1
      %p122 = por %p120, %p121
      %p123 = scmp.ne.s32.totalorder %s114, %s115
      %p124 = scmp.eq.s32.totalorder %s20, 0
      %p125 = por %p123, %p124
      %p126 = scmp.ne.s32.totalorder %s114, %s115
      %p127 = scmp.eq.s32.totalorder %s21, 1
      %p128 = por %p126, %p127
      %p130 = scmp.ne.s32.totalorder %s115, %s129
      %p131 = scmp.eq.s32.totalorder %s21, 0
      %p132 = por %p130, %p131
      %s133 = ssub.s32 %s15, %s22
      %p134 = scmp.eq.s32.totalorder %s133, 0
      %s136 = sadd.s32 %s135, 1
      %s137 = scalar_select %p134, %s135, %s136
      %p140 = pneg %p134
      %p141 = scmp.eq.s32.totalorder %s15, 1
      %p142 = por %p140, %p141
      %p143 = scmp.ne.s32.totalorder %s135, %s138
      %p144 = scmp.eq.s32.totalorder %s15, 0
      %p145 = por %p143, %p144
      %p146 = scmp.ne.s32.totalorder %s135, %s138
      %p147 = scmp.eq.s32.totalorder %s20, 1
      %p148 = por %p146, %p147
      %p149 = scmp.ne.s32.totalorder %s138, %s139
      %p150 = scmp.eq.s32.totalorder %s20, 0
      %p151 = por %p149, %p150
      %p152 = scmp.ne.s32.totalorder %s138, %s139
      %p153 = scmp.eq.s32.totalorder %s21, 1
      %p154 = por %p152, %p153
      %p156 = scmp.ne.s32.totalorder %s139, %s155
      %p157 = scmp.eq.s32.totalorder %s21, 0
      %p158 = por %p156, %p157
      %p159 = scmp.le.s32.totalorder 1, %s15
      %p160 = scmp.lt.s32.totalorder %s15, 3
      %p161 = pnand %p159, %p160
      %p162 = pneg %p161
      // Predicated region
      $region9: #{pinn_forward.1} parent=5 // pred_check
        _
      $region10: #{pinn_forward.1} parent=5 // pred_check_branch
        %164 = sbr.rel (%p161) target = $region12
      $region11: #{pinn_forward.1} parent=5 // pred_region
        %s165 = ssub.s32 %s15, 1
        // Predicated region
        $region13: #{pinn_forward.1} parent=11 // pred_check
          %p166 = pneg %p62
        $region14: #{pinn_forward.1} parent=11 // pred_check_branch
          %168 = sbr.rel (%p166) target = $region16
        $region15: #{pinn_forward.1} parent=11 // pred_region
          _
        $region16: #{pinn_forward.1} parent=11 // pred_fallthru
          _
        // Predicated region
        $region17: #{pinn_forward.1} parent=11 // pred_check
          %p169 = pneg %p83
        $region18: #{pinn_forward.1} parent=11 // pred_check_branch
          %171 = sbr.rel (%p169) target = $region20
        $region19: #{pinn_forward.1} parent=11 // pred_region
          %s173 = ssub.s32 4096, 4096
          %174 = vsyncadd [#allocation3], %s173
          %s175 = sshll.u32 [#allocation2], 4
          %s176 = int_to_ptr.vmem [resolvable:$true] %s175
          %181 = dma.hbm_to_vmem [thread:$0]  %s2, 4096, %s176, [#allocation3], 128, 128, 8
        $region20: #{pinn_forward.1} parent=11 // pred_fallthru
          _
        // Predicated region
        $region21: #{pinn_forward.1} parent=11 // pred_check
          %p182 = pneg %p104
        $region22: #{pinn_forward.1} parent=11 // pred_check_branch
          %184 = sbr.rel (%p182) target = $region24
        $region23: #{pinn_forward.1} parent=11 // pred_region
          _
        $region24: #{pinn_forward.1} parent=11 // pred_fallthru
          _
        // Predicated region
        $region25: #{pinn_forward.1} parent=11 // pred_check
          %p185 = pneg %p125
        $region26: #{pinn_forward.1} parent=11 // pred_check_branch
          %187 = sbr.rel (%p185) target = $region28
        $region27: #{pinn_forward.1} parent=11 // pred_region
          _
        $region28: #{pinn_forward.1} parent=11 // pred_fallthru
          _
      $region12: #{pinn_forward.1} parent=5 // pred_fallthru
        _
      %p188 = scmp.lt.s32.totalorder %s15, 2
      // Predicated region
      $region29: #{pinn_forward.1} parent=5 // pred_check
        %p189 = pneg %p188
      $region30: #{pinn_forward.1} parent=5 // pred_check_branch
        %191 = sbr.rel (%p189) target = $region32
      $region31: #{pinn_forward.1} parent=5 // pred_region
        // Predicated region
        $region33: #{pinn_forward.1} parent=31 // pred_check
          %p192 = pneg %p35
        $region34: #{pinn_forward.1} parent=31 // pred_check_branch
          %194 = sbr.rel (%p192) target = $region36
        $region35: #{pinn_forward.1} parent=31 // pred_region
          %p195 = scmp.lt.s32.totalorder %s15, 1
          %s196 = scalar_select %p195, %s15, 1
          %s197 = smul.addr %s196, 2
          %s198 = scalar_lea.vmem %s0, %s197
        $region36: #{pinn_forward.1} parent=31 // pred_fallthru
          _
      $region32: #{pinn_forward.1} parent=5 // pred_fallthru
        _
      %p199 = scmp.le.s32.totalorder 1, %s15
      %p200 = scmp.lt.s32.totalorder %s15, 3
      %p201 = pnand %p199, %p200
      %p202 = pneg %p201
      // Predicated region
      $region37: #{pinn_forward.1} parent=5 // pred_check
        _
      $region38: #{pinn_forward.1} parent=5 // pred_check_branch
        %204 = sbr.rel (%p201) target = $region40
      $region39: #{pinn_forward.1} parent=5 // pred_region
        %s205 = ssub.s32 %s15, 1
        // Predicated region
        $region41: #{pinn_forward.1} parent=39 // pred_check
          %p206 = pneg %p83
        $region42: #{pinn_forward.1} parent=39 // pred_check_branch
          %208 = sbr.rel (%p206) target = $region44
        $region43: #{pinn_forward.1} parent=39 // pred_region
          %209 = dma.done [#allocation3], 4096
        $region44: #{pinn_forward.1} parent=39 // pred_fallthru
          _
        %p210 = scmp.lt.s32.totalorder %s20, 1
        %s211 = scalar_select %p210, %s20, 1
        %s212 = smul.addr %s211, 2
        %s213 = scalar_lea.vmem %s0, %s212
        %p214 = pneg %p41
        %p215 = pneg %p38
        %p216 = pneg %p62
        %p217 = pneg %p59
        %p218 = pneg %p83
        %p219 = pneg %p80
        %p220 = pneg %p104
        %p221 = pneg %p101
        %p222 = pneg %p125
        %p223 = pneg %p122
        %p224 = pneg %p151
        %p225 = pneg %p148
        %s226 = sand.u32 %s138, 1
        %s227 = scalar_lea.sflag [#allocation4], %s226
        %s228 = sand.u32 %s138, 1
        %s229 = smul.addr %s228, 4
        %s230 = scalar_lea.vmem [#allocation5], %s229
        %p231 = scmp.lt.s32.totalorder %s20, 1
        %s232 = scalar_select %p231, %s20, 1
        %s233 = smul.addr %s232, 2
        %s234 = scalar_lea.vmem %s0, %s233
        %v235 = vld [vmem:[%s234] sm:$0x3]
        %v236 = vld [vmem:[%s1] sm:$0xff]
        %v237 = vld [vmem:[%s1 + $0x8] sm:$0xff]
        %v238 = vld [vmem:[%s1 + $0x10] sm:$0xff]
        %v239 = vld [vmem:[%s1 + $0x18] sm:$0xff]
        %v240 = vld [vmem:[%s1 + $0x20] sm:$0xff]
        %v241 = vld [vmem:[%s1 + $0x28] sm:$0xff]
        %v242 = vld [vmem:[%s1 + $0x30] sm:$0xff]
        %v243 = vld [vmem:[%s1 + $0x38] sm:$0xff]
        %245 = vset.pattern.permute.xlu0 0
        %246 = vperm.xlu0 %245, %v236
        %v247 = vpop.permute.xlu0 %246
        %250 = vset.pattern.permute.xlu0 0
        %251 = vperm.xlu0 %250, %v237
        %v252 = vpop.permute.xlu0 %251
        %255 = vset.pattern.permute.xlu0 0
        %256 = vperm.xlu0 %255, %v238
        %v257 = vpop.permute.xlu0 %256
        %260 = vset.pattern.permute.xlu0 0
        %261 = vperm.xlu0 %260, %v239
        %v262 = vpop.permute.xlu0 %261
        %265 = vset.pattern.permute.xlu0 0
        %266 = vperm.xlu0 %265, %v240
        %v267 = vpop.permute.xlu0 %266
        %270 = vset.pattern.permute.xlu0 0
        %271 = vperm.xlu0 %270, %v241
        %v272 = vpop.permute.xlu0 %271
        %275 = vset.pattern.permute.xlu0 0
        %276 = vperm.xlu0 %275, %v242
        %v277 = vpop.permute.xlu0 %276
        %280 = vset.pattern.permute.xlu0 0
        %281 = vperm.xlu0 %280, %v243
        %v282 = vpop.permute.xlu0 %281
        %v284 = vlaneseq
        %v285 = vshrl.u32 %v284, 7
        %v286 = vsub.s32 0, %v285
        %v287 = vrot.slane %v235, %v286
        %v288 = vmul.f32 %v247, %v287
        %v289 = vmul.f32 %v252, %v287
        %v290 = vmul.f32 %v257, %v287
        %v291 = vmul.f32 %v262, %v287
        %v292 = vmul.f32 %v267, %v287
        %v293 = vmul.f32 %v272, %v287
        %v294 = vmul.f32 %v277, %v287
        %v295 = vmul.f32 %v282, %v287
        %296 = vset.pattern.permute.xlu0 1
        %297 = vperm.xlu0 %296, %v236
        %v298 = vpop.permute.xlu0 %297
        %300 = vset.pattern.permute.xlu0 1
        %301 = vperm.xlu0 %300, %v237
        %v302 = vpop.permute.xlu0 %301
        %304 = vset.pattern.permute.xlu0 1
        %305 = vperm.xlu0 %304, %v238
        %v306 = vpop.permute.xlu0 %305
        %308 = vset.pattern.permute.xlu0 1
        %309 = vperm.xlu0 %308, %v239
        %v310 = vpop.permute.xlu0 %309
        %312 = vset.pattern.permute.xlu0 1
        %313 = vperm.xlu0 %312, %v240
        %v314 = vpop.permute.xlu0 %313
        %316 = vset.pattern.permute.xlu0 1
        %317 = vperm.xlu0 %316, %v241
        %v318 = vpop.permute.xlu0 %317
        %320 = vset.pattern.permute.xlu0 1
        %321 = vperm.xlu0 %320, %v242
        %v322 = vpop.permute.xlu0 %321
        %324 = vset.pattern.permute.xlu0 1
        %325 = vperm.xlu0 %324, %v243
        %v326 = vpop.permute.xlu0 %325
        %v328 = vlaneseq
        %v329 = vshrl.u32 %v328, 7
        %v330 = vsub.s32 1, %v329
        %v331 = vrot.slane %v235, %v330
        %v332 = vmul.f32 %v298, %v331
        %v333 = vmul.f32 %v302, %v331
        %v334 = vmul.f32 %v306, %v331
        %v335 = vmul.f32 %v310, %v331
        %v336 = vmul.f32 %v314, %v331
        %v337 = vmul.f32 %v318, %v331
        %v338 = vmul.f32 %v322, %v331
        %v339 = vmul.f32 %v326, %v331
        %v340 = vadd.f32 %v288, %v332
        %v341 = vadd.f32 %v289, %v333
        %v342 = vadd.f32 %v290, %v334
        %v343 = vadd.f32 %v291, %v335
        %v344 = vadd.f32 %v292, %v336
        %v345 = vadd.f32 %v293, %v337
        %v346 = vadd.f32 %v294, %v338
        %v347 = vadd.f32 %v295, %v339
        %v348 = vld [vmem:[%s4] sm:$0xff]
        %v349 = vld [vmem:[%s4 + $0x8] sm:$0xff]
        %v350 = vld [vmem:[%s4 + $0x10] sm:$0xff]
        %v351 = vld [vmem:[%s4 + $0x18] sm:$0xff]
        %v352 = vld [vmem:[%s4 + $0x20] sm:$0xff]
        %v353 = vld [vmem:[%s4 + $0x28] sm:$0xff]
        %v354 = vld [vmem:[%s4 + $0x30] sm:$0xff]
        %v355 = vld [vmem:[%s4 + $0x38] sm:$0xff]
        %357 = vset.pattern.permute.xlu0 0
        %358 = vperm.xlu0 %357, %v348
        %v359 = vpop.permute.xlu0 %358
        %362 = vset.pattern.permute.xlu0 0
        %363 = vperm.xlu0 %362, %v349
        %v364 = vpop.permute.xlu0 %363
        %367 = vset.pattern.permute.xlu0 0
        %368 = vperm.xlu0 %367, %v350
        %v369 = vpop.permute.xlu0 %368
        %372 = vset.pattern.permute.xlu0 0
        %373 = vperm.xlu0 %372, %v351
        %v374 = vpop.permute.xlu0 %373
        %377 = vset.pattern.permute.xlu0 0
        %378 = vperm.xlu0 %377, %v352
        %v379 = vpop.permute.xlu0 %378
        %382 = vset.pattern.permute.xlu0 0
        %383 = vperm.xlu0 %382, %v353
        %v384 = vpop.permute.xlu0 %383
        %387 = vset.pattern.permute.xlu0 0
        %388 = vperm.xlu0 %387, %v354
        %v389 = vpop.permute.xlu0 %388
        %392 = vset.pattern.permute.xlu0 0
        %393 = vperm.xlu0 %392, %v355
        %v394 = vpop.permute.xlu0 %393
        %v396 = vadd.f32 %v340, %v359
        %v397 = vadd.f32 %v341, %v364
        %v398 = vadd.f32 %v342, %v369
        %v399 = vadd.f32 %v343, %v374
        %v400 = vadd.f32 %v344, %v379
        %v401 = vadd.f32 %v345, %v384
        %v402 = vadd.f32 %v346, %v389
        %v403 = vadd.f32 %v347, %v394
        %v404 = vtanh.pop %v396
        %v405 = vtanh.pop %v397
        %v406 = vtanh.pop %v398
        %v407 = vtanh.pop %v399
        %v408 = vtanh.pop %v400
        %v409 = vtanh.pop %v401
        %v410 = vtanh.pop %v402
        %v411 = vtanh.pop %v403
        %v412 = vld [vmem:[#allocation2] sm:$0xff]
        %v413 = vld [vmem:[#allocation2 + $0x8] sm:$0xff]
        %v414 = vld [vmem:[#allocation2 + $0x10] sm:$0xff]
        %v415 = vld [vmem:[#allocation2 + $0x18] sm:$0xff]
        %v416 = vld [vmem:[#allocation2 + $0x20] sm:$0xff]
        %v417 = vld [vmem:[#allocation2 + $0x28] sm:$0xff]
        %v418 = vld [vmem:[#allocation2 + $0x30] sm:$0xff]
        %v419 = vld [vmem:[#allocation2 + $0x38] sm:$0xff]
        %420 = vset.pattern.permute.xlu0 1
        %421 = vperm.xlu0 %420, %v348
        %v422 = vpop.permute.xlu0 %421
        %424 = vset.pattern.permute.xlu0 1
        %425 = vperm.xlu0 %424, %v349
        %v426 = vpop.permute.xlu0 %425
        %428 = vset.pattern.permute.xlu0 1
        %429 = vperm.xlu0 %428, %v350
        %v430 = vpop.permute.xlu0 %429
        %432 = vset.pattern.permute.xlu0 1
        %433 = vperm.xlu0 %432, %v351
        %v434 = vpop.permute.xlu0 %433
        %436 = vset.pattern.permute.xlu0 1
        %437 = vperm.xlu0 %436, %v352
        %v438 = vpop.permute.xlu0 %437
        %440 = vset.pattern.permute.xlu0 1
        %441 = vperm.xlu0 %440, %v353
        %v442 = vpop.permute.xlu0 %441
        %444 = vset.pattern.permute.xlu0 1
        %445 = vperm.xlu0 %444, %v354
        %v446 = vpop.permute.xlu0 %445
        %448 = vset.pattern.permute.xlu0 1
        %449 = vperm.xlu0 %448, %v355
        %v450 = vpop.permute.xlu0 %449
        %vm452 = vcmask 523264
        %v454 = vsel %vm452, %v412, 0
        %v457 = vsel %vm452, %v413, 0
        %v460 = vsel %vm452, %v414, 0
        %v463 = vsel %vm452, %v415, 0
        %v466 = vsel %vm452, %v416, 0
        %v469 = vsel %vm452, %v417, 0
        %v472 = vsel %vm452, %v418, 0
        %v475 = vsel %vm452, %v419, 0
        %477 = vmatprep.subr.mxu0 0.0
        %478 = vmatpush1.msra.mxu0 0.0
        %479 = vmatprep.subr.mxu0 0.0
        %480 = vmatpush1.msra.mxu0 0.0
        %481 = vmatprep.subr.mxu0 0.0
        %482 = vmatpush1.msra.mxu0 0.0
        %483 = vmatprep.subr.mxu0 0.0
        %484 = vmatpush1.msra.mxu0 0.0
        %485 = vmatprep.subr.mxu0 0.0
        %486 = vmatpush1.msra.mxu0 0.0
        %487 = vmatprep.subr.mxu0 0.0
        %488 = vmatpush1.msra.mxu0 0.0
        %489 = vmatprep.subr.mxu0 0.0
        %490 = vmatpush1.msra.mxu0 0.0
        %491 = vmatprep.subr.mxu0 0.0
        %492 = vmatpush1.msra.mxu0 0.0
        %493 = vmatprep.subr.mxu0 0.0
        %494 = vmatpush1.msra.mxu0 %v411
        %495 = vmatprep.subr.mxu0 0.0
        %496 = vmatpush1.msra.mxu0 %v410
        %497 = vmatprep.subr.mxu0 0.0
        %498 = vmatpush1.msra.mxu0 %v409
        %499 = vmatprep.subr.mxu0 0.0
        %500 = vmatpush1.msra.mxu0 %v408
        %501 = vmatprep.subr.mxu0 0.0
        %502 = vmatpush1.msra.mxu0 %v407
        %503 = vmatprep.subr.mxu0 0.0
        %504 = vmatpush1.msra.mxu0 %v406
        %505 = vmatprep.subr.mxu0 0.0
        %506 = vmatpush1.msra.mxu0 %v405
        %507 = vmatprep.subr.mxu0 0.0
        %508 = vmatpush1.msra.mxu0 %v404
        %509 = vmatprep.subr.mxu0 0.0
        %510 = vmatpush2.msra.mxu0 0.0
        %511 = vmatprep.subr.mxu0 0.0
        %512 = vmatpush2.msra.mxu0 0.0
        %513 = vmatprep.subr.mxu0 0.0
        %514 = vmatpush2.msra.mxu0 0.0
        %515 = vmatprep.subr.mxu0 0.0
        %516 = vmatpush2.msra.mxu0 0.0
        %517 = vmatprep.subr.mxu0 0.0
        %518 = vmatpush2.msra.mxu0 0.0
        %519 = vmatprep.subr.mxu0 0.0
        %520 = vmatpush2.msra.mxu0 0.0
        %521 = vmatprep.subr.mxu0 0.0
        %522 = vmatpush2.msra.mxu0 0.0
        %523 = vmatprep.subr.mxu0 0.0
        %524 = vmatpush2.msra.mxu0 0.0
        %525 = vmatprep.subr.mxu0 0.0
        %526 = vmatpush2.msra.mxu0 0.0
        %527 = vmatprep.subr.mxu0 0.0
        %528 = vmatpush2.msra.mxu0 0.0
        %529 = vmatprep.subr.mxu0 0.0
        %530 = vmatpush2.msra.mxu0 0.0
        %531 = vmatprep.subr.mxu0 0.0
        %532 = vmatpush2.msra.mxu0 0.0
        %533 = vmatprep.subr.mxu0 0.0
        %534 = vmatpush2.msra.mxu0 0.0
        %535 = vmatprep.subr.mxu0 0.0
        %536 = vmatpush2.msra.mxu0 0.0
        %537 = vmatprep.subr.mxu0 0.0
        %538 = vmatpush2.msra.mxu0 0.0
        %539 = vmatprep.subr.mxu0 0.0
        %540 = vmatpush2.msra.mxu0 0.0
        %541 = vmatprep.mubr.f32.mxu0 0.0
        %542 = vmatmul.mubr.f32.gmra.mxu0 %v454
        %v543 = vpop.f32.mrf.mxu0
        %v544 = vadd.f32 %v422, %v543
        %v545 = vpop.f32.mrf.mxu0
        %546 = vmatprep.mubr.f32.mxu0 0.0
        %547 = vmatmul.mubr.f32.gmra.mxu0 %v457
        %v548 = vpop.f32.mrf.mxu0
        %v549 = vadd.f32 %v426, %v548
        %v550 = vpop.f32.mrf.mxu0
        %551 = vmatprep.mubr.f32.mxu0 0.0
        %552 = vmatmul.mubr.f32.gmra.mxu0 %v460
        %v553 = vpop.f32.mrf.mxu0
        %v554 = vadd.f32 %v430, %v553
        %v555 = vpop.f32.mrf.mxu0
        %556 = vmatprep.mubr.f32.mxu0 0.0
        %557 = vmatmul.mubr.f32.gmra.mxu0 %v463
        %v558 = vpop.f32.mrf.mxu0
        %v559 = vadd.f32 %v434, %v558
        %v560 = vpop.f32.mrf.mxu0
        %561 = vmatprep.mubr.f32.mxu0 0.0
        %562 = vmatmul.mubr.f32.gmra.mxu0 %v466
        %v563 = vpop.f32.mrf.mxu0
        %v564 = vadd.f32 %v438, %v563
        %v565 = vpop.f32.mrf.mxu0
        %566 = vmatprep.mubr.f32.mxu0 0.0
        %567 = vmatmul.mubr.f32.gmra.mxu0 %v469
        %v568 = vpop.f32.mrf.mxu0
        %v569 = vadd.f32 %v442, %v568
        %v570 = vpop.f32.mrf.mxu0
        %571 = vmatprep.mubr.f32.mxu0 0.0
        %572 = vmatmul.mubr.f32.gmra.mxu0 %v472
        %v573 = vpop.f32.mrf.mxu0
        %v574 = vadd.f32 %v446, %v573
        %v575 = vpop.f32.mrf.mxu0
        %576 = vmatprep.mubr.f32.mxu0 0.0
        %577 = vmatmul.mubr.f32.gmra.mxu0 %v475
        %v578 = vpop.f32.mrf.mxu0
        %v579 = vadd.f32 %v450, %v578
        %v580 = vpop.f32.mrf.mxu0
        %581 = vdwg.mxu0
        %v582 = vtanh.pop %v544
        %v583 = vtanh.pop %v549
        %v584 = vtanh.pop %v554
        %v585 = vtanh.pop %v559
        %v586 = vtanh.pop %v564
        %v587 = vtanh.pop %v569
        %v588 = vtanh.pop %v574
        %v589 = vtanh.pop %v579
        %s590 = scalar_lea.vmem [#allocation2], 64
        %v591 = vld [vmem:[%s590] sm:$0xff]
        %v592 = vld [vmem:[%s590 + $0x8] sm:$0xff]
        %v593 = vld [vmem:[%s590 + $0x10] sm:$0xff]
        %v594 = vld [vmem:[%s590 + $0x18] sm:$0xff]
        %v595 = vld [vmem:[%s590 + $0x20] sm:$0xff]
        %v596 = vld [vmem:[%s590 + $0x28] sm:$0xff]
        %v597 = vld [vmem:[%s590 + $0x30] sm:$0xff]
        %v598 = vld [vmem:[%s590 + $0x38] sm:$0xff]
        %599 = vset.pattern.permute.xlu0 2
        %600 = vperm.xlu0 %599, %v348
        %v601 = vpop.permute.xlu0 %600
        %603 = vset.pattern.permute.xlu0 2
        %604 = vperm.xlu0 %603, %v349
        %v605 = vpop.permute.xlu0 %604
        %607 = vset.pattern.permute.xlu0 2
        %608 = vperm.xlu0 %607, %v350
        %v609 = vpop.permute.xlu0 %608
        %611 = vset.pattern.permute.xlu0 2
        %612 = vperm.xlu0 %611, %v351
        %v613 = vpop.permute.xlu0 %612
        %615 = vset.pattern.permute.xlu0 2
        %616 = vperm.xlu0 %615, %v352
        %v617 = vpop.permute.xlu0 %616
        %619 = vset.pattern.permute.xlu0 2
        %620 = vperm.xlu0 %619, %v353
        %v621 = vpop.permute.xlu0 %620
        %623 = vset.pattern.permute.xlu0 2
        %624 = vperm.xlu0 %623, %v354
        %v625 = vpop.permute.xlu0 %624
        %627 = vset.pattern.permute.xlu0 2
        %628 = vperm.xlu0 %627, %v355
        %v629 = vpop.permute.xlu0 %628
        %v632 = vsel %vm452, %v591, 0
        %v635 = vsel %vm452, %v592, 0
        %v638 = vsel %vm452, %v593, 0
        %v641 = vsel %vm452, %v594, 0
        %v644 = vsel %vm452, %v595, 0
        %v647 = vsel %vm452, %v596, 0
        %v650 = vsel %vm452, %v597, 0
        %v653 = vsel %vm452, %v598, 0
        %655 = vmatprep.subr.mxu0 0.0
        %656 = vmatpush1.msra.mxu0 0.0
        %657 = vmatprep.subr.mxu0 0.0
        %658 = vmatpush1.msra.mxu0 0.0
        %659 = vmatprep.subr.mxu0 0.0
        %660 = vmatpush1.msra.mxu0 0.0
        %661 = vmatprep.subr.mxu0 0.0
        %662 = vmatpush1.msra.mxu0 0.0
        %663 = vmatprep.subr.mxu0 0.0
        %664 = vmatpush1.msra.mxu0 0.0
        %665 = vmatprep.subr.mxu0 0.0
        %666 = vmatpush1.msra.mxu0 0.0
        %667 = vmatprep.subr.mxu0 0.0
        %668 = vmatpush1.msra.mxu0 0.0
        %669 = vmatprep.subr.mxu0 0.0
        %670 = vmatpush1.msra.mxu0 0.0
        %671 = vmatprep.subr.mxu0 0.0
        %672 = vmatpush1.msra.mxu0 %v589
        %673 = vmatprep.subr.mxu0 0.0
        %674 = vmatpush1.msra.mxu0 %v588
        %675 = vmatprep.subr.mxu0 0.0
        %676 = vmatpush1.msra.mxu0 %v587
        %677 = vmatprep.subr.mxu0 0.0
        %678 = vmatpush1.msra.mxu0 %v586
        %679 = vmatprep.subr.mxu0 0.0
        %680 = vmatpush1.msra.mxu0 %v585
        %681 = vmatprep.subr.mxu0 0.0
        %682 = vmatpush1.msra.mxu0 %v584
        %683 = vmatprep.subr.mxu0 0.0
        %684 = vmatpush1.msra.mxu0 %v583
        %685 = vmatprep.subr.mxu0 0.0
        %686 = vmatpush1.msra.mxu0 %v582
        %687 = vmatprep.subr.mxu0 0.0
        %688 = vmatpush2.msra.mxu0 0.0
        %689 = vmatprep.subr.mxu0 0.0
        %690 = vmatpush2.msra.mxu0 0.0
        %691 = vmatprep.subr.mxu0 0.0
        %692 = vmatpush2.msra.mxu0 0.0
        %693 = vmatprep.subr.mxu0 0.0
        %694 = vmatpush2.msra.mxu0 0.0
        %695 = vmatprep.subr.mxu0 0.0
        %696 = vmatpush2.msra.mxu0 0.0
        %697 = vmatprep.subr.mxu0 0.0
        %698 = vmatpush2.msra.mxu0 0.0
        %699 = vmatprep.subr.mxu0 0.0
        %700 = vmatpush2.msra.mxu0 0.0
        %701 = vmatprep.subr.mxu0 0.0
        %702 = vmatpush2.msra.mxu0 0.0
        %703 = vmatprep.subr.mxu0 0.0
        %704 = vmatpush2.msra.mxu0 0.0
        %705 = vmatprep.subr.mxu0 0.0
        %706 = vmatpush2.msra.mxu0 0.0
        %707 = vmatprep.subr.mxu0 0.0
        %708 = vmatpush2.msra.mxu0 0.0
        %709 = vmatprep.subr.mxu0 0.0
        %710 = vmatpush2.msra.mxu0 0.0
        %711 = vmatprep.subr.mxu0 0.0
        %712 = vmatpush2.msra.mxu0 0.0
        %713 = vmatprep.subr.mxu0 0.0
        %714 = vmatpush2.msra.mxu0 0.0
        %715 = vmatprep.subr.mxu0 0.0
        %716 = vmatpush2.msra.mxu0 0.0
        %717 = vmatprep.subr.mxu0 0.0
        %718 = vmatpush2.msra.mxu0 0.0
        %719 = vmatprep.mubr.f32.mxu0 0.0
        %720 = vmatmul.mubr.f32.gmra.mxu0 %v632
        %v721 = vpop.f32.mrf.mxu0
        %v722 = vadd.f32 %v601, %v721
        %v723 = vpop.f32.mrf.mxu0
        %724 = vmatprep.mubr.f32.mxu0 0.0
        %725 = vmatmul.mubr.f32.gmra.mxu0 %v635
        %v726 = vpop.f32.mrf.mxu0
        %v727 = vadd.f32 %v605, %v726
        %v728 = vpop.f32.mrf.mxu0
        %729 = vmatprep.mubr.f32.mxu0 0.0
        %730 = vmatmul.mubr.f32.gmra.mxu0 %v638
        %v731 = vpop.f32.mrf.mxu0
        %v732 = vadd.f32 %v609, %v731
        %v733 = vpop.f32.mrf.mxu0
        %734 = vmatprep.mubr.f32.mxu0 0.0
        %735 = vmatmul.mubr.f32.gmra.mxu0 %v641
        %v736 = vpop.f32.mrf.mxu0
        %v737 = vadd.f32 %v613, %v736
        %v738 = vpop.f32.mrf.mxu0
        %739 = vmatprep.mubr.f32.mxu0 0.0
        %740 = vmatmul.mubr.f32.gmra.mxu0 %v644
        %v741 = vpop.f32.mrf.mxu0
        %v742 = vadd.f32 %v617, %v741
        %v743 = vpop.f32.mrf.mxu0
        %744 = vmatprep.mubr.f32.mxu0 0.0
        %745 = vmatmul.mubr.f32.gmra.mxu0 %v647
        %v746 = vpop.f32.mrf.mxu0
        %v747 = vadd.f32 %v621, %v746
        %v748 = vpop.f32.mrf.mxu0
        %749 = vmatprep.mubr.f32.mxu0 0.0
        %750 = vmatmul.mubr.f32.gmra.mxu0 %v650
        %v751 = vpop.f32.mrf.mxu0
        %v752 = vadd.f32 %v625, %v751
        %v753 = vpop.f32.mrf.mxu0
        %754 = vmatprep.mubr.f32.mxu0 0.0
        %755 = vmatmul.mubr.f32.gmra.mxu0 %v653
        %v756 = vpop.f32.mrf.mxu0
        %v757 = vadd.f32 %v629, %v756
        %v758 = vpop.f32.mrf.mxu0
        %759 = vdwg.mxu0
        %v760 = vtanh.pop %v722
        %v761 = vtanh.pop %v727
        %v762 = vtanh.pop %v732
        %v763 = vtanh.pop %v737
        %v764 = vtanh.pop %v742
        %v765 = vtanh.pop %v747
        %v766 = vtanh.pop %v752
        %v767 = vtanh.pop %v757
        %s768 = scalar_lea.vmem [#allocation2], 128
        %v769 = vld [vmem:[%s768] sm:$0xff]
        %v770 = vld [vmem:[%s768 + $0x8] sm:$0xff]
        %v771 = vld [vmem:[%s768 + $0x10] sm:$0xff]
        %v772 = vld [vmem:[%s768 + $0x18] sm:$0xff]
        %v773 = vld [vmem:[%s768 + $0x20] sm:$0xff]
        %v774 = vld [vmem:[%s768 + $0x28] sm:$0xff]
        %v775 = vld [vmem:[%s768 + $0x30] sm:$0xff]
        %v776 = vld [vmem:[%s768 + $0x38] sm:$0xff]
        %777 = vset.pattern.permute.xlu0 3
        %778 = vperm.xlu0 %777, %v348
        %v779 = vpop.permute.xlu0 %778
        %781 = vset.pattern.permute.xlu0 3
        %782 = vperm.xlu0 %781, %v349
        %v783 = vpop.permute.xlu0 %782
        %785 = vset.pattern.permute.xlu0 3
        %786 = vperm.xlu0 %785, %v350
        %v787 = vpop.permute.xlu0 %786
        %789 = vset.pattern.permute.xlu0 3
        %790 = vperm.xlu0 %789, %v351
        %v791 = vpop.permute.xlu0 %790
        %793 = vset.pattern.permute.xlu0 3
        %794 = vperm.xlu0 %793, %v352
        %v795 = vpop.permute.xlu0 %794
        %797 = vset.pattern.permute.xlu0 3
        %798 = vperm.xlu0 %797, %v353
        %v799 = vpop.permute.xlu0 %798
        %801 = vset.pattern.permute.xlu0 3
        %802 = vperm.xlu0 %801, %v354
        %v803 = vpop.permute.xlu0 %802
        %805 = vset.pattern.permute.xlu0 3
        %806 = vperm.xlu0 %805, %v355
        %v807 = vpop.permute.xlu0 %806
        %v810 = vsel %vm452, %v769, 0
        %v813 = vsel %vm452, %v770, 0
        %v816 = vsel %vm452, %v771, 0
        %v819 = vsel %vm452, %v772, 0
        %v822 = vsel %vm452, %v773, 0
        %v825 = vsel %vm452, %v774, 0
        %v828 = vsel %vm452, %v775, 0
        %v831 = vsel %vm452, %v776, 0
        %833 = vmatprep.subr.mxu0 0.0
        %834 = vmatpush1.msra.mxu0 0.0
        %835 = vmatprep.subr.mxu0 0.0
        %836 = vmatpush1.msra.mxu0 0.0
        %837 = vmatprep.subr.mxu0 0.0
        %838 = vmatpush1.msra.mxu0 0.0
        %839 = vmatprep.subr.mxu0 0.0
        %840 = vmatpush1.msra.mxu0 0.0
        %841 = vmatprep.subr.mxu0 0.0
        %842 = vmatpush1.msra.mxu0 0.0
        %843 = vmatprep.subr.mxu0 0.0
        %844 = vmatpush1.msra.mxu0 0.0
        %845 = vmatprep.subr.mxu0 0.0
        %846 = vmatpush1.msra.mxu0 0.0
        %847 = vmatprep.subr.mxu0 0.0
        %848 = vmatpush1.msra.mxu0 0.0
        %849 = vmatprep.subr.mxu0 0.0
        %850 = vmatpush1.msra.mxu0 %v767
        %851 = vmatprep.subr.mxu0 0.0
        %852 = vmatpush1.msra.mxu0 %v766
        %853 = vmatprep.subr.mxu0 0.0
        %854 = vmatpush1.msra.mxu0 %v765
        %855 = vmatprep.subr.mxu0 0.0
        %856 = vmatpush1.msra.mxu0 %v764
        %857 = vmatprep.subr.mxu0 0.0
        %858 = vmatpush1.msra.mxu0 %v763
        %859 = vmatprep.subr.mxu0 0.0
        %860 = vmatpush1.msra.mxu0 %v762
        %861 = vmatprep.subr.mxu0 0.0
        %862 = vmatpush1.msra.mxu0 %v761
        %863 = vmatprep.subr.mxu0 0.0
        %864 = vmatpush1.msra.mxu0 %v760
        %865 = vmatprep.subr.mxu0 0.0
        %866 = vmatpush2.msra.mxu0 0.0
        %867 = vmatprep.subr.mxu0 0.0
        %868 = vmatpush2.msra.mxu0 0.0
        %869 = vmatprep.subr.mxu0 0.0
        %870 = vmatpush2.msra.mxu0 0.0
        %871 = vmatprep.subr.mxu0 0.0
        %872 = vmatpush2.msra.mxu0 0.0
        %873 = vmatprep.subr.mxu0 0.0
        %874 = vmatpush2.msra.mxu0 0.0
        %875 = vmatprep.subr.mxu0 0.0
        %876 = vmatpush2.msra.mxu0 0.0
        %877 = vmatprep.subr.mxu0 0.0
        %878 = vmatpush2.msra.mxu0 0.0
        %879 = vmatprep.subr.mxu0 0.0
        %880 = vmatpush2.msra.mxu0 0.0
        %881 = vmatprep.subr.mxu0 0.0
        %882 = vmatpush2.msra.mxu0 0.0
        %883 = vmatprep.subr.mxu0 0.0
        %884 = vmatpush2.msra.mxu0 0.0
        %885 = vmatprep.subr.mxu0 0.0
        %886 = vmatpush2.msra.mxu0 0.0
        %887 = vmatprep.subr.mxu0 0.0
        %888 = vmatpush2.msra.mxu0 0.0
        %889 = vmatprep.subr.mxu0 0.0
        %890 = vmatpush2.msra.mxu0 0.0
        %891 = vmatprep.subr.mxu0 0.0
        %892 = vmatpush2.msra.mxu0 0.0
        %893 = vmatprep.subr.mxu0 0.0
        %894 = vmatpush2.msra.mxu0 0.0
        %895 = vmatprep.subr.mxu0 0.0
        %896 = vmatpush2.msra.mxu0 0.0
        %897 = vmatprep.mubr.f32.mxu0 0.0
        %898 = vmatmul.mubr.f32.gmra.mxu0 %v810
        %v899 = vpop.f32.mrf.mxu0
        %v900 = vadd.f32 %v779, %v899
        %v901 = vpop.f32.mrf.mxu0
        %902 = vmatprep.mubr.f32.mxu0 0.0
        %903 = vmatmul.mubr.f32.gmra.mxu0 %v813
        %v904 = vpop.f32.mrf.mxu0
        %v905 = vadd.f32 %v783, %v904
        %v906 = vpop.f32.mrf.mxu0
        %907 = vmatprep.mubr.f32.mxu0 0.0
        %908 = vmatmul.mubr.f32.gmra.mxu0 %v816
        %v909 = vpop.f32.mrf.mxu0
        %v910 = vadd.f32 %v787, %v909
        %v911 = vpop.f32.mrf.mxu0
        %912 = vmatprep.mubr.f32.mxu0 0.0
        %913 = vmatmul.mubr.f32.gmra.mxu0 %v819
        %v914 = vpop.f32.mrf.mxu0
        %v915 = vadd.f32 %v791, %v914
        %v916 = vpop.f32.mrf.mxu0
        %917 = vmatprep.mubr.f32.mxu0 0.0
        %918 = vmatmul.mubr.f32.gmra.mxu0 %v822
        %v919 = vpop.f32.mrf.mxu0
        %v920 = vadd.f32 %v795, %v919
        %v921 = vpop.f32.mrf.mxu0
        %922 = vmatprep.mubr.f32.mxu0 0.0
        %923 = vmatmul.mubr.f32.gmra.mxu0 %v825
        %v924 = vpop.f32.mrf.mxu0
        %v925 = vadd.f32 %v799, %v924
        %v926 = vpop.f32.mrf.mxu0
        %927 = vmatprep.mubr.f32.mxu0 0.0
        %928 = vmatmul.mubr.f32.gmra.mxu0 %v828
        %v929 = vpop.f32.mrf.mxu0
        %v930 = vadd.f32 %v803, %v929
        %v931 = vpop.f32.mrf.mxu0
        %932 = vmatprep.mubr.f32.mxu0 0.0
        %933 = vmatmul.mubr.f32.gmra.mxu0 %v831
        %v934 = vpop.f32.mrf.mxu0
        %v935 = vadd.f32 %v807, %v934
        %v936 = vpop.f32.mrf.mxu0
        %937 = vdwg.mxu0
        %v938 = vtanh.pop %v900
        %v939 = vtanh.pop %v905
        %v940 = vtanh.pop %v910
        %v941 = vtanh.pop %v915
        %v942 = vtanh.pop %v920
        %v943 = vtanh.pop %v925
        %v944 = vtanh.pop %v930
        %v945 = vtanh.pop %v935
        %s946 = scalar_lea.vmem [#allocation2], 192
        %v947 = vld [vmem:[%s946] sm:$0xff]
        %v948 = vld [vmem:[%s946 + $0x8] sm:$0xff]
        %v949 = vld [vmem:[%s946 + $0x10] sm:$0xff]
        %v950 = vld [vmem:[%s946 + $0x18] sm:$0xff]
        %v951 = vld [vmem:[%s946 + $0x20] sm:$0xff]
        %v952 = vld [vmem:[%s946 + $0x28] sm:$0xff]
        %v953 = vld [vmem:[%s946 + $0x30] sm:$0xff]
        %v954 = vld [vmem:[%s946 + $0x38] sm:$0xff]
        %955 = vset.pattern.permute.xlu0 4
        %956 = vperm.xlu0 %955, %v348
        %v957 = vpop.permute.xlu0 %956
        %959 = vset.pattern.permute.xlu0 4
        %960 = vperm.xlu0 %959, %v349
        %v961 = vpop.permute.xlu0 %960
        %963 = vset.pattern.permute.xlu0 4
        %964 = vperm.xlu0 %963, %v350
        %v965 = vpop.permute.xlu0 %964
        %967 = vset.pattern.permute.xlu0 4
        %968 = vperm.xlu0 %967, %v351
        %v969 = vpop.permute.xlu0 %968
        %971 = vset.pattern.permute.xlu0 4
        %972 = vperm.xlu0 %971, %v352
        %v973 = vpop.permute.xlu0 %972
        %975 = vset.pattern.permute.xlu0 4
        %976 = vperm.xlu0 %975, %v353
        %v977 = vpop.permute.xlu0 %976
        %979 = vset.pattern.permute.xlu0 4
        %980 = vperm.xlu0 %979, %v354
        %v981 = vpop.permute.xlu0 %980
        %983 = vset.pattern.permute.xlu0 4
        %984 = vperm.xlu0 %983, %v355
        %v985 = vpop.permute.xlu0 %984
        %v988 = vsel %vm452, %v947, 0
        %v991 = vsel %vm452, %v948, 0
        %v994 = vsel %vm452, %v949, 0
        %v997 = vsel %vm452, %v950, 0
        %v1000 = vsel %vm452, %v951, 0
        %v1003 = vsel %vm452, %v952, 0
        %v1006 = vsel %vm452, %v953, 0
        %v1009 = vsel %vm452, %v954, 0
        %1011 = vmatprep.subr.mxu0 0.0
        %1012 = vmatpush1.msra.mxu0 0.0
        %1013 = vmatprep.subr.mxu0 0.0
        %1014 = vmatpush1.msra.mxu0 0.0
        %1015 = vmatprep.subr.mxu0 0.0
        %1016 = vmatpush1.msra.mxu0 0.0
        %1017 = vmatprep.subr.mxu0 0.0
        %1018 = vmatpush1.msra.mxu0 0.0
        %1019 = vmatprep.subr.mxu0 0.0
        %1020 = vmatpush1.msra.mxu0 0.0
        %1021 = vmatprep.subr.mxu0 0.0
        %1022 = vmatpush1.msra.mxu0 0.0
        %1023 = vmatprep.subr.mxu0 0.0
        %1024 = vmatpush1.msra.mxu0 0.0
        %1025 = vmatprep.subr.mxu0 0.0
        %1026 = vmatpush1.msra.mxu0 0.0
        %1027 = vmatprep.subr.mxu0 0.0
        %1028 = vmatpush1.msra.mxu0 %v945
        %1029 = vmatprep.subr.mxu0 0.0
        %1030 = vmatpush1.msra.mxu0 %v944
        %1031 = vmatprep.subr.mxu0 0.0
        %1032 = vmatpush1.msra.mxu0 %v943
        %1033 = vmatprep.subr.mxu0 0.0
        %1034 = vmatpush1.msra.mxu0 %v942
        %1035 = vmatprep.subr.mxu0 0.0
        %1036 = vmatpush1.msra.mxu0 %v941
        %1037 = vmatprep.subr.mxu0 0.0
        %1038 = vmatpush1.msra.mxu0 %v940
        %1039 = vmatprep.subr.mxu0 0.0
        %1040 = vmatpush1.msra.mxu0 %v939
        %1041 = vmatprep.subr.mxu0 0.0
        %1042 = vmatpush1.msra.mxu0 %v938
        %1043 = vmatprep.subr.mxu0 0.0
        %1044 = vmatpush2.msra.mxu0 0.0
        %1045 = vmatprep.subr.mxu0 0.0
        %1046 = vmatpush2.msra.mxu0 0.0
        %1047 = vmatprep.subr.mxu0 0.0
        %1048 = vmatpush2.msra.mxu0 0.0
        %1049 = vmatprep.subr.mxu0 0.0
        %1050 = vmatpush2.msra.mxu0 0.0
        %1051 = vmatprep.subr.mxu0 0.0
        %1052 = vmatpush2.msra.mxu0 0.0
        %1053 = vmatprep.subr.mxu0 0.0
        %1054 = vmatpush2.msra.mxu0 0.0
        %1055 = vmatprep.subr.mxu0 0.0
        %1056 = vmatpush2.msra.mxu0 0.0
        %1057 = vmatprep.subr.mxu0 0.0
        %1058 = vmatpush2.msra.mxu0 0.0
        %1059 = vmatprep.subr.mxu0 0.0
        %1060 = vmatpush2.msra.mxu0 0.0
        %1061 = vmatprep.subr.mxu0 0.0
        %1062 = vmatpush2.msra.mxu0 0.0
        %1063 = vmatprep.subr.mxu0 0.0
        %1064 = vmatpush2.msra.mxu0 0.0
        %1065 = vmatprep.subr.mxu0 0.0
        %1066 = vmatpush2.msra.mxu0 0.0
        %1067 = vmatprep.subr.mxu0 0.0
        %1068 = vmatpush2.msra.mxu0 0.0
        %1069 = vmatprep.subr.mxu0 0.0
        %1070 = vmatpush2.msra.mxu0 0.0
        %1071 = vmatprep.subr.mxu0 0.0
        %1072 = vmatpush2.msra.mxu0 0.0
        %1073 = vmatprep.subr.mxu0 0.0
        %1074 = vmatpush2.msra.mxu0 0.0
        %1075 = vmatprep.mubr.f32.mxu0 0.0
        %1076 = vmatmul.mubr.f32.gmra.mxu0 %v988
        %v1077 = vpop.f32.mrf.mxu0
        %v1078 = vadd.f32 %v957, %v1077
        %v1079 = vpop.f32.mrf.mxu0
        %1080 = vmatprep.mubr.f32.mxu0 0.0
        %1081 = vmatmul.mubr.f32.gmra.mxu0 %v991
        %v1082 = vpop.f32.mrf.mxu0
        %v1083 = vadd.f32 %v961, %v1082
        %v1084 = vpop.f32.mrf.mxu0
        %1085 = vmatprep.mubr.f32.mxu0 0.0
        %1086 = vmatmul.mubr.f32.gmra.mxu0 %v994
        %v1087 = vpop.f32.mrf.mxu0
        %v1088 = vadd.f32 %v965, %v1087
        %v1089 = vpop.f32.mrf.mxu0
        %1090 = vmatprep.mubr.f32.mxu0 0.0
        %1091 = vmatmul.mubr.f32.gmra.mxu0 %v997
        %v1092 = vpop.f32.mrf.mxu0
        %v1093 = vadd.f32 %v969, %v1092
        %v1094 = vpop.f32.mrf.mxu0
        %1095 = vmatprep.mubr.f32.mxu0 0.0
        %1096 = vmatmul.mubr.f32.gmra.mxu0 %v1000
        %v1097 = vpop.f32.mrf.mxu0
        %v1098 = vadd.f32 %v973, %v1097
        %v1099 = vpop.f32.mrf.mxu0
        %1100 = vmatprep.mubr.f32.mxu0 0.0
        %1101 = vmatmul.mubr.f32.gmra.mxu0 %v1003
        %v1102 = vpop.f32.mrf.mxu0
        %v1103 = vadd.f32 %v977, %v1102
        %v1104 = vpop.f32.mrf.mxu0
        %1105 = vmatprep.mubr.f32.mxu0 0.0
        %1106 = vmatmul.mubr.f32.gmra.mxu0 %v1006
        %v1107 = vpop.f32.mrf.mxu0
        %v1108 = vadd.f32 %v981, %v1107
        %v1109 = vpop.f32.mrf.mxu0
        %1110 = vmatprep.mubr.f32.mxu0 0.0
        %1111 = vmatmul.mubr.f32.gmra.mxu0 %v1009
        %v1112 = vpop.f32.mrf.mxu0
        %v1113 = vadd.f32 %v985, %v1112
        %v1114 = vpop.f32.mrf.mxu0
        %1115 = vdwg.mxu0
        %v1116 = vtanh.pop %v1078
        %v1117 = vtanh.pop %v1083
        %v1118 = vtanh.pop %v1088
        %v1119 = vtanh.pop %v1093
        %v1120 = vtanh.pop %v1098
        %v1121 = vtanh.pop %v1103
        %v1122 = vtanh.pop %v1108
        %v1123 = vtanh.pop %v1113
        %v1124 = vld [vmem:[%s3] sm:$0xff]
        %v1126 = vsel %vm452, %v1124, 0
        %1128 = vmatprep.subr.mxu0 0.0
        %1129 = vmatpush1.msra.mxu0 0.0
        %1130 = vmatprep.subr.mxu0 0.0
        %1131 = vmatpush1.msra.mxu0 0.0
        %1132 = vmatprep.subr.mxu0 0.0
        %1133 = vmatpush1.msra.mxu0 0.0
        %1134 = vmatprep.subr.mxu0 0.0
        %1135 = vmatpush1.msra.mxu0 0.0
        %1136 = vmatprep.subr.mxu0 0.0
        %1137 = vmatpush1.msra.mxu0 0.0
        %1138 = vmatprep.subr.mxu0 0.0
        %1139 = vmatpush1.msra.mxu0 0.0
        %1140 = vmatprep.subr.mxu0 0.0
        %1141 = vmatpush1.msra.mxu0 0.0
        %1142 = vmatprep.subr.mxu0 0.0
        %1143 = vmatpush1.msra.mxu0 0.0
        %1144 = vmatprep.subr.mxu0 0.0
        %1145 = vmatpush1.msra.mxu0 %v1123
        %1146 = vmatprep.subr.mxu0 0.0
        %1147 = vmatpush1.msra.mxu0 %v1122
        %1148 = vmatprep.subr.mxu0 0.0
        %1149 = vmatpush1.msra.mxu0 %v1121
        %1150 = vmatprep.subr.mxu0 0.0
        %1151 = vmatpush1.msra.mxu0 %v1120
        %1152 = vmatprep.subr.mxu0 0.0
        %1153 = vmatpush1.msra.mxu0 %v1119
        %1154 = vmatprep.subr.mxu0 0.0
        %1155 = vmatpush1.msra.mxu0 %v1118
        %1156 = vmatprep.subr.mxu0 0.0
        %1157 = vmatpush1.msra.mxu0 %v1117
        %1158 = vmatprep.subr.mxu0 0.0
        %1159 = vmatpush1.msra.mxu0 %v1116
        %1160 = vmatprep.subr.mxu0 0.0
        %1161 = vmatpush2.msra.mxu0 0.0
        %1162 = vmatprep.subr.mxu0 0.0
        %1163 = vmatpush2.msra.mxu0 0.0
        %1164 = vmatprep.subr.mxu0 0.0
        %1165 = vmatpush2.msra.mxu0 0.0
        %1166 = vmatprep.subr.mxu0 0.0
        %1167 = vmatpush2.msra.mxu0 0.0
        %1168 = vmatprep.subr.mxu0 0.0
        %1169 = vmatpush2.msra.mxu0 0.0
        %1170 = vmatprep.subr.mxu0 0.0
        %1171 = vmatpush2.msra.mxu0 0.0
        %1172 = vmatprep.subr.mxu0 0.0
        %1173 = vmatpush2.msra.mxu0 0.0
        %1174 = vmatprep.subr.mxu0 0.0
        %1175 = vmatpush2.msra.mxu0 0.0
        %1176 = vmatprep.subr.mxu0 0.0
        %1177 = vmatpush2.msra.mxu0 0.0
        %1178 = vmatprep.subr.mxu0 0.0
        %1179 = vmatpush2.msra.mxu0 0.0
        %1180 = vmatprep.subr.mxu0 0.0
        %1181 = vmatpush2.msra.mxu0 0.0
        %1182 = vmatprep.subr.mxu0 0.0
        %1183 = vmatpush2.msra.mxu0 0.0
        %1184 = vmatprep.subr.mxu0 0.0
        %1185 = vmatpush2.msra.mxu0 0.0
        %1186 = vmatprep.subr.mxu0 0.0
        %1187 = vmatpush2.msra.mxu0 0.0
        %1188 = vmatprep.subr.mxu0 0.0
        %1189 = vmatpush2.msra.mxu0 0.0
        %1190 = vmatprep.subr.mxu0 0.0
        %1191 = vmatpush2.msra.mxu0 0.0
        %1192 = vmatprep.mubr.f32.mxu0 0.0
        %1193 = vmatmul.mubr.f32.gmra.mxu0 %v1126
        %v1194 = vpop.f32.mrf.mxu0
        %v1195 = vadd.f32 0.0, %v1194
        %v1196 = vpop.f32.mrf.mxu0
        %1197 = vdwg.mxu0
        %v1198 = vld [vmem:[%s4] sm:$0x7]
        %1200 = vset.pattern.permute.xlu0 5
        %1201 = vperm.xlu0 %1200, %v1198
        %v1202 = vpop.permute.xlu0 %1201
        %v1204 = vadd.f32 %v1195, %v1202
        %1205 = vst [vmem:[%s230] sm:$0x7] %v1204
        %s1206 = sand.u32 %s138, 1
        %s1207 = scalar_lea.sflag [#allocation4], %s1206
        %s1208 = sand.u32 %s138, 1
        %s1209 = smul.addr %s1208, 4
        %s1210 = scalar_lea.vmem [#allocation5], %s1209
        // Predicated region
        $region45: #{pinn_forward.1} parent=39 // pred_check
          %p1211 = pneg %p148
        $region46: #{pinn_forward.1} parent=39 // pred_check_branch
          %1213 = sbr.rel (%p1211) target = $region48
        $region47: #{pinn_forward.1} parent=39 // pred_region
          %s1215 = ssub.s32 64, 64
          %1216 = vsyncadd %s1207, %s1215
          %s1217 = smul.addr %s20, 64
          %s1218 = scalar_lea.hbm %s5, %s1217
          %s1220 = sshll.u32 %s1210, 4
          %s1221 = int_to_ptr.vmem [resolvable:$true] %s1220
          %1223 = dma.vmem_to_hbm [thread:$0]  %s1221, 64, %s1218, %s1207
        $region48: #{pinn_forward.1} parent=39 // pred_fallthru
          _
      $region40: #{pinn_forward.1} parent=5 // pred_fallthru
        _
      %p1224 = scmp.le.s32.totalorder 2, %s15
      // Predicated region
      $region49: #{pinn_forward.1} parent=5 // pred_check
        %p1225 = pneg %p1224
      $region50: #{pinn_forward.1} parent=5 // pred_check_branch
        %1227 = sbr.rel (%p1225) target = $region52
      $region51: #{pinn_forward.1} parent=5 // pred_region
        %s1228 = ssub.s32 %s15, 2
        // Predicated region
        $region53: #{pinn_forward.1} parent=51 // pred_check
          %p1229 = pneg %p154
        $region54: #{pinn_forward.1} parent=51 // pred_check_branch
          %1231 = sbr.rel (%p1229) target = $region56
        $region55: #{pinn_forward.1} parent=51 // pred_region
          %s1232 = sand.u32 %s139, 1
          %s1233 = scalar_lea.sflag [#allocation4], %s1232
          %s1234 = sand.u32 %s139, 1
          %s1235 = smul.addr %s1234, 4
          %s1236 = scalar_lea.vmem [#allocation5], %s1235
          %1237 = dma.done %s1233, 64
        $region56: #{pinn_forward.1} parent=51 // pred_fallthru
          _
      $region52: #{pinn_forward.1} parent=5 // pred_fallthru
        _
    $region6: #{pinn_forward.1} parent=1 // loop_footer
      %s19 = sadd.s32 1, %s15
    $region7: #{pinn_forward.1} parent=1 // loop_footer_branch
      %14 = sbr.rel target = $region3
    $region8: #{pinn_forward.1} parent=1 // loop_exit
      _
    %1238 = vsyncpa [#allocation3], 1
    %s1239 = scalar_lea.sflag [#allocation3], 1
    %1240 = vsyncpa %s1239, 1
    %1241 = vsyncpa [#allocation4], 1
    %s1242 = scalar_lea.sflag [#allocation4], 1
    %1243 = vsyncpa %s1242, 1

</llo_original>
